<compile_context>
chip_gen: v7x
topology: tpu7x:2x2x1
jax: 0.10.0
libtpu: 0.0.40
codegen_flags: <defaults>
</compile_context>

<pallas_src>
import functools
import jax
import jax.numpy as jnp
from jax.experimental import pallas as pl
from jax.experimental.pallas import tpu as pltpu

# --- config (mirrors the nn.Module __init__ arguments) ---
SEQ_VOCAB = 5        # config.seq_vocab_size
MODEL_DIM = 32       # config.model_dim
MAX_LEN = 64         # config.max_len
INIT_RANGE = 0.02    # config.initializer_range
LN_EPS = 1e-5        # nn.LayerNorm default eps


def _pair_ln_kernel(e1c_ref, e2c_ref, gamma_ref, beta_ref, ind_ref, out_ref,
                    *, ti, tj):
    """One (ti, tj) tile of pair_latent for batch b = program_id(0).

    pair[b,i,j,:] = LN(e1[b,j,:] + e2[b,i,:]); for b in {0,1} channel 0 is
    replaced by the dense (p1,p2) indicator (0 everywhere, 1 at the pairs).
    e1c/e2c are pre-centered rows, so the LN mean subtraction is already done
    and only the variance reduction remains in-kernel.
    """
    i = pl.program_id(1)
    j = pl.program_id(2)
    row0 = pl.multiple_of(i * ti, ti)
    col0 = pl.multiple_of(j * tj, tj)

    # Resident (1, L, D) rows; slice the current windows in VMEM.
    e2c = e2c_ref[0, pl.ds(row0, ti), :]            # (ti, D) -> varies with i
    e1c = e1c_ref[0, pl.ds(col0, tj), :]            # (tj, D) -> varies with j

    pairc = e2c[:, None, :] + e1c[None, :, :]       # (ti, tj, D), already centered
    var = jnp.mean(pairc * pairc, axis=-1, keepdims=True)   # (ti, tj, 1)
    inv = jax.lax.rsqrt(var + LN_EPS)
    y = pairc * inv
    y = y * gamma_ref[0][None, None, :] + beta_ref[0][None, None, :]

    # Batches 0 and 1: channel 0 <- indicator (zeros + ones at (p1, p2)).
    # One select pass handles both the zeroing and the in-kernel "scatter".
    b = pl.program_id(0)
    lane = jax.lax.broadcasted_iota(jnp.int32, y.shape, 2)
    y = jnp.where(jnp.logical_and(b < 2, lane == 0),
                  ind_ref[...].astype(y.dtype), y)

    out_ref[0] = y.astype(out_ref.dtype)


def _pos_embedding(src_seq, emb_table, w_pos, max_len):
    """PosEmbedding.forward (rel_pos_enc=True branch; Linear has bias=False)."""
    B, L = src_seq.shape
    D = emb_table.shape[1]
    scale = jnp.sqrt(jnp.float32(D // 2))
    tok = emb_table[src_seq] * scale                           # [B, L, D]
    # Linear(one_hot(clip(arange(L), 0, max_len-1))) == row-gather of W^T.
    idx = jnp.clip(jnp.arange(L), 0, max_len - 1)
    posenc = w_pos.T[idx]                                      # [L, D]
    return tok + posenc[None, :, :]


def _pick_tile(L, cap=256):
    """Largest tile <= cap that divides L (multiple of 8), else full L."""
    if L <= cap:
        return L
    t = (cap // 8) * 8
    while t >= 8:
        if L % t == 0:
            return t
        t -= 8
    return L


def embed_sequence2matrix(src_seq, p1, p2, params, *, ti=None, tj=None,
                          out_dtype=jnp.float32):
    B, L = src_seq.shape
    D = MODEL_DIM
    ti = _pick_tile(L) if ti is None else ti
    tj = _pick_tile(L) if tj is None else tj
    assert L % ti == 0 and L % tj == 0, "tile must divide L"
    assert (ti % 8 == 0 or ti == L) and (tj % 8 == 0 or tj == L), \
        "tiles must be multiples of 8 (or the full L)"

    e1 = _pos_embedding(src_seq, params["emb1"], params["wpos1"], MAX_LEN)
    e2 = _pos_embedding(src_seq, params["emb2"], params["wpos2"], MAX_LEN)
    # Hoist the LayerNorm mean: mean(e1[j]+e2[i]) = mean(e1[j]) + mean(e2[i]),
    # so centering the tiny [B,L,D] rows up-front makes (e1c+e2c) mean-free.
    e1c = e1 - jnp.mean(e1, axis=-1, keepdims=True)
    e2c = e2 - jnp.mean(e2, axis=-1, keepdims=True)

    gamma = params["ln_w"].reshape(1, D)
    beta = params["ln_b"].reshape(1, D)

    # Dense (L, L, 1) indicator of the (p1, p2) pairs, consumed in-kernel so
    # the [B,L,L,D] tensor is written exactly once (no post-kernel scatter).
    ind = jnp.zeros((L, L, 1), jnp.float32).at[p1, p2, 0].set(1.0)

    kernel = functools.partial(_pair_ln_kernel, ti=ti, tj=tj)

    out = pl.pallas_call(
        kernel,
        out_shape=jax.ShapeDtypeStruct((B, L, L, D), out_dtype),
        grid_spec=pltpu.PrefetchScalarGridSpec(
            num_scalar_prefetch=0,
            grid=(B, L // ti, L // tj),
            in_specs=[
                # e1c/e2c stay resident per batch (index depends only on b);
                # the ti/tj windows are sliced inside the kernel.
                pl.BlockSpec((1, L, D), lambda b, i, j: (b, 0, 0)),
                pl.BlockSpec((1, L, D), lambda b, i, j: (b, 0, 0)),
                pl.BlockSpec((1, D), lambda b, i, j: (0, 0)),
                pl.BlockSpec((1, D), lambda b, i, j: (0, 0)),
                pl.BlockSpec((ti, tj, 1), lambda b, i, j: (i, j, 0)),
            ],
            out_specs=pl.BlockSpec((1, ti, tj, D),
                                   lambda b, i, j: (b, i, j, 0)),
        ),
        compiler_params=pltpu.CompilerParams(
            dimension_semantics=("parallel", "parallel", "parallel"),
            vmem_limit_bytes=48 * 1024 * 1024),
    )(e1c, e2c, gamma, beta, ind)
    return out


def reference(src_seq, p1, p2, params):
    """Pure-JAX transcription of the PyTorch forward, for verification."""
    e1 = _pos_embedding(src_seq, params["emb1"], params["wpos1"], MAX_LEN)
    e2 = _pos_embedding(src_seq, params["emb2"], params["wpos2"], MAX_LEN)
    pair = e1[:, None, :, :] + e2[:, :, None, :]          # [B, L, L, D]
    mean = jnp.mean(pair, axis=-1, keepdims=True)
    var = jnp.mean((pair - mean) ** 2, axis=-1, keepdims=True)
    pair = (pair - mean) * jax.lax.rsqrt(var + LN_EPS)
    pair = pair * params["ln_w"] + params["ln_b"]
    for b in range(min(2, pair.shape[0])):
        pair = pair.at[b, :, :, 0].set(0.0)
        pair = pair.at[b, p1, p2, 0].set(1.0)
    return pair


if __name__ == "__main__":
    key = jax.random.PRNGKey(0)
    B, L = 2, 16
    ks = jax.random.split(key, 5)

    # deterministic parameter init (matches module __init__ shapes / scheme)
    params = {
        "emb1": (jax.random.normal(ks[0], (SEQ_VOCAB, MODEL_DIM), jnp.float32)
                 * INIT_RANGE),
        "emb2": (jax.random.normal(ks[1], (SEQ_VOCAB, MODEL_DIM), jnp.float32)
                 * INIT_RANGE),
        "wpos1": (jax.random.normal(ks[2], (MODEL_DIM, MAX_LEN), jnp.float32)
                  * INIT_RANGE),  # nn.Linear(max_len, model_dim, bias=False).weight
        "wpos2": (jax.random.normal(ks[3], (MODEL_DIM, MAX_LEN), jnp.float32)
                  * INIT_RANGE),
        "ln_w": jnp.ones((MODEL_DIM,), jnp.float32),   # nn.LayerNorm defaults
        "ln_b": jnp.zeros((MODEL_DIM,), jnp.float32),
    }

    src_seq = jax.random.randint(ks[4], (B, L), 0, SEQ_VOCAB, dtype=jnp.int32)
    p1 = jnp.array([1, 3, 5, 10], dtype=jnp.int32)
    p2 = jnp.array([14, 12, 9, 6], dtype=jnp.int32)

    out = embed_sequence2matrix(src_seq, p1, p2, params)
    out = jax.block_until_ready(out)

    ref = reference(src_seq, p1, p2, params)
    assert out.shape == (B, L, L, MODEL_DIM)
    assert jnp.allclose(out, ref, atol=3e-5, rtol=3e-5), "mismatch vs reference"

    print("KERNEL_OK")
</pallas_src>

<mosaic_0001>
module attributes {stable_mosaic.version = 11 : i64} {
  func.func @_pair_ln_kernel(%arg0: i32, %arg1: i32, %arg2: i32, %arg3: memref<1x16x32xf32, #tpu.memory_space<vmem>>, %arg4: memref<1x16x32xf32, #tpu.memory_space<vmem>>, %arg5: memref<1x32xf32, #tpu.memory_space<vmem>>, %arg6: memref<1x32xf32, #tpu.memory_space<vmem>>, %arg7: memref<16x16x1xf32, #tpu.memory_space<vmem>>, %arg8: memref<1x16x16x32xf32, #tpu.memory_space<vmem>>) attributes {dimension_semantics = [#tpu.dimension_semantics<parallel>, #tpu.dimension_semantics<parallel>, #tpu.dimension_semantics<parallel>], iteration_bounds = array<i64: 2, 1, 1>, scalar_prefetch = 0 : i64, scratch_operands = 0 : i64, tpu.core_type = #tpu.core_type<tc>, window_params = [{transform_indices = @transform_0, window_bounds = array<i64: 1, 16, 32>}, {transform_indices = @transform_1, window_bounds = array<i64: 1, 16, 32>}, {pipeline_mode = #tpu.pipeline_mode<synchronous>, transform_indices = @transform_2, window_bounds = array<i64: 1, 32>}, {pipeline_mode = #tpu.pipeline_mode<synchronous>, transform_indices = @transform_3, window_bounds = array<i64: 1, 32>}, {transform_indices = @transform_4, window_bounds = array<i64: 16, 16, 1>}, {transform_indices = @transform_5, window_bounds = array<i64: 1, 16, 16, 32>}]} {
    %c16_i32 = arith.constant 16 : i32
    %0 = arith.muli %arg1, %c16_i32 : i32
    %1 = tpu.assume_multiple %0, 16 : i32
    %c16_i32_0 = arith.constant 16 : i32
    %2 = arith.muli %arg2, %c16_i32_0 : i32
    %3 = tpu.assume_multiple %2, 16 : i32
    %c0 = arith.constant 0 : index
    %4 = arith.index_cast %1 : i32 to index
    %c0_1 = arith.constant 0 : index
    %5 = vector.load %arg4[%c0, %4, %c0_1] : memref<1x16x32xf32, #tpu.memory_space<vmem>>, vector<1x16x32xf32>
    %6 = vector.shape_cast %5 : vector<1x16x32xf32> to vector<16x32xf32>
    %c0_2 = arith.constant 0 : index
    %7 = arith.index_cast %3 : i32 to index
    %c0_3 = arith.constant 0 : index
    %8 = vector.load %arg3[%c0_2, %7, %c0_3] : memref<1x16x32xf32, #tpu.memory_space<vmem>>, vector<1x16x32xf32>
    %9 = vector.shape_cast %8 : vector<1x16x32xf32> to vector<16x32xf32>
    %10 = vector.shape_cast %6 : vector<16x32xf32> to vector<16x1x32xf32>
    %11 = vector.shape_cast %9 : vector<16x32xf32> to vector<1x16x32xf32>
    %12 = vector.broadcast %10 : vector<16x1x32xf32> to vector<16x16x32xf32>
    %13 = vector.broadcast %11 : vector<1x16x32xf32> to vector<16x16x32xf32>
    %14 = arith.addf %12, %13 : vector<16x16x32xf32>
    %15 = arith.mulf %14, %14 : vector<16x16x32xf32>
    %cst = arith.constant dense<0.000000e+00> : vector<16x16xf32>
    %16 = vector.multi_reduction <add>, %15, %cst [2] : vector<16x16x32xf32> to vector<16x16xf32>
    %17 = vector.shape_cast %16 : vector<16x16xf32> to vector<16x16x1xf32>
    %cst_4 = arith.constant 3.200000e+01 : f32
    %18 = vector.broadcast %cst_4 : f32 to vector<16x16x1xf32>
    %19 = arith.divf %17, %18 : vector<16x16x1xf32>
    %cst_5 = arith.constant 9.99999974E-6 : f32
    %20 = vector.broadcast %cst_5 : f32 to vector<16x16x1xf32>
    %21 = arith.addf %19, %20 : vector<16x16x1xf32>
    %22 = math.rsqrt %21 : vector<16x16x1xf32>
    %23 = vector.broadcast %22 : vector<16x16x1xf32> to vector<16x16x32xf32>
    %24 = arith.mulf %14, %23 : vector<16x16x32xf32>
    %c0_6 = arith.constant 0 : index
    %c0_7 = arith.constant 0 : index
    %25 = vector.load %arg5[%c0_6, %c0_7] : memref<1x32xf32, #tpu.memory_space<vmem>>, vector<1x32xf32>
    %26 = vector.shape_cast %25 : vector<1x32xf32> to vector<32xf32>
    %27 = vector.shape_cast %26 : vector<32xf32> to vector<1x1x32xf32>
    %28 = vector.broadcast %27 : vector<1x1x32xf32> to vector<16x16x32xf32>
    %29 = arith.mulf %24, %28 : vector<16x16x32xf32>
    %c0_8 = arith.constant 0 : index
    %c0_9 = arith.constant 0 : index
    %30 = vector.load %arg6[%c0_8, %c0_9] : memref<1x32xf32, #tpu.memory_space<vmem>>, vector<1x32xf32>
    %31 = vector.shape_cast %30 : vector<1x32xf32> to vector<32xf32>
    %32 = vector.shape_cast %31 : vector<32xf32> to vector<1x1x32xf32>
    %33 = vector.broadcast %32 : vector<1x1x32xf32> to vector<16x16x32xf32>
    %34 = arith.addf %29, %33 : vector<16x16x32xf32>
    %35 = tpu.iota {dimensions = array<i32: 2>} : vector<16x16x32xi32>
    %c2_i32 = arith.constant 2 : i32
    %36 = arith.cmpi slt, %arg0, %c2_i32 : i32
    %c0_i32 = arith.constant 0 : i32
    %37 = vector.broadcast %c0_i32 : i32 to vector<16x16x32xi32>
    %38 = arith.cmpi eq, %35, %37 : vector<16x16x32xi32>
    %39 = vector.broadcast %36 : i1 to vector<16x16x32xi1>
    %40 = arith.andi %39, %38 : vector<16x16x32xi1>
    %c0_10 = arith.constant 0 : index
    %c0_11 = arith.constant 0 : index
    %c0_12 = arith.constant 0 : index
    %41 = vector.load %arg7[%c0_10, %c0_11, %c0_12] : memref<16x16x1xf32, #tpu.memory_space<vmem>>, vector<16x16x1xf32>
    %42 = vector.shape_cast %41 : vector<16x16x1xf32> to vector<16x16x1xf32>
    %43 = vector.broadcast %42 : vector<16x16x1xf32> to vector<16x16x32xf32>
    %44 = arith.select %40, %43, %34 : vector<16x16x32xi1>, vector<16x16x32xf32>
    %c0_13 = arith.constant 0 : index
    %c0_14 = arith.constant 0 : index
    %c0_15 = arith.constant 0 : index
    %c0_16 = arith.constant 0 : index
    %45 = vector.load %arg8[%c0_13, %c0_14, %c0_15, %c0_16] : memref<1x16x16x32xf32, #tpu.memory_space<vmem>>, vector<1x16x16x32xf32>
    %46 = vector.shape_cast %45 : vector<1x16x16x32xf32> to vector<16x16x32xf32>
    %47 = vector.shape_cast %44 : vector<16x16x32xf32> to vector<1x16x16x32xf32>
    tpu.vector_store %arg8[%c0_13, %c0_14, %c0_15, %c0_16], %47 {strides = array<i32>} : memref<1x16x16x32xf32, #tpu.memory_space<vmem>>, vector<1x16x16x32xf32>,
    return
  }
  func.func @transform_0(%arg0: i32, %arg1: i32, %arg2: i32) -> (i32, i32, i32) {
    %c0_i32 = arith.constant 0 : i32
    %c0_i32_0 = arith.constant 0 : i32
    %c0_i32_1 = arith.constant 0 : i32
    return %arg0, %c0_i32, %c0_i32_0 : i32, i32, i32
  }
  func.func @transform_1(%arg0: i32, %arg1: i32, %arg2: i32) -> (i32, i32, i32) {
    %c0_i32 = arith.constant 0 : i32
    %c0_i32_0 = arith.constant 0 : i32
    %c0_i32_1 = arith.constant 0 : i32
    return %arg0, %c0_i32, %c0_i32_0 : i32, i32, i32
  }
  func.func @transform_2(%arg0: i32, %arg1: i32, %arg2: i32) -> (i32, i32) {
    %c0_i32 = arith.constant 0 : i32
    %c0_i32_0 = arith.constant 0 : i32
    %c0_i32_1 = arith.constant 0 : i32
    return %c0_i32, %c0_i32_0 : i32, i32
  }
  func.func @transform_3(%arg0: i32, %arg1: i32, %arg2: i32) -> (i32, i32) {
    %c0_i32 = arith.constant 0 : i32
    %c0_i32_0 = arith.constant 0 : i32
    %c0_i32_1 = arith.constant 0 : i32
    return %c0_i32, %c0_i32_0 : i32, i32
  }
  func.func @transform_4(%arg0: i32, %arg1: i32, %arg2: i32) -> (i32, i32, i32) {
    %c0_i32 = arith.constant 0 : i32
    %c0_i32_0 = arith.constant 0 : i32
    return %arg1, %arg2, %c0_i32 : i32, i32, i32
  }
  func.func @transform_5(%arg0: i32, %arg1: i32, %arg2: i32) -> (i32, i32, i32, i32) {
    %c0_i32 = arith.constant 0 : i32
    %c0_i32_0 = arith.constant 0 : i32
    return %arg0, %arg1, %arg2, %c0_i32 : i32, i32, i32, i32
  }
}

</mosaic_0001>

<llo_original>
// kernel: tpu_custom_call.1
$region0: #{tpu_custom_call.1}
  #allocation0 [shape = 'u32[]', space=smem, size = 0x4, offset = 0x4, fixed_abs, tag = 'smem constant byte address 0x4 - core index']
  #allocation1 [shape = 'u32[144,128]{1,0:T(1,128)}', space=vmem, size = 0x12000, scoped, tag = 'internal scratch']
  %s0 = inlined_call_operand.vmem [shape: f32[2,16,32], index: 0, kind: input, shape index: {}]
  %s1 = inlined_call_operand.vmem [shape: f32[2,16,32], index: 1, kind: input, shape index: {}]
  %s2 = inlined_call_operand.vmem [shape: f32[1,32], index: 2, kind: input, shape index: {}]
  %s3 = inlined_call_operand.vmem [shape: f32[1,32], index: 3, kind: input, shape index: {}]
  %s4 = inlined_call_operand.vmem [shape: f32[16,16,1], index: 4, kind: input, shape index: {}]
  %s5 = inlined_call_operand.hbm [shape: f32[2,16,16,32], index: 5, kind: output, shape index: {}]
  %s6 = sld [smem:[#allocation0]]
  $region53: #{tpu_custom_call.1} parent=0
    _
  %s8 = ssub.s32 1, %s6
  %s9 = scalar_select 0, %s8, %s6
  $region1: #{tpu_custom_call.1} parent=0
    #allocation2 [shape = 'u8[262144]{0}', space=vmem, size = 0x40000, scoped, tag = 'output window, operand 0']
    #allocation3 [shape = 's32[2]{0}', space=sflag, size = 0x8, scoped, tag = 'scoped memory for tpu_custom_call.1']
    %10 = vsyncpa [#allocation3], 0
    %s11 = scalar_lea.sflag [#allocation3], 1
    %12 = vsyncpa %s11, 0
    loop: start=0, step=1, limit=4
    $region2: #{tpu_custom_call.1} parent=1 // loop_pre_header
      _
    $region3: #{tpu_custom_call.1} parent=1 // loop_header
      %s14 = sphi 0, %s18
      %p15 = scmp.ge.s32.totalorder %s14, 4
      %s21 = sphi 0, %s40
      %s22 = sphi 0, %s36
      %s23 = sphi 0, %s32
      %s24 = sphi 0, %s21
      %s25 = sphi 0, %s22
      %s26 = sphi 0, %s23
      %s27 = sphi 0, %s24
      %s28 = sphi 0, %s25
      %s29 = sphi 0, %s26
      %s43 = sphi 0, %s45
      %s46 = sphi 0, %s43
      %s47 = sphi 0, %s46
      %s63 = sphi 0, %s47
      %s69 = sphi 0, %s71
      %s72 = sphi 0, %s69
      %s73 = sphi 0, %s72
      %s89 = sphi 0, %s73
      %s93 = sphi 0, %s93
      %s95 = sphi 0, %s93
      %s96 = sphi 0, %s95
      %s110 = sphi 0, %s96
      %s114 = sphi 0, %s114
      %s116 = sphi 0, %s114
      %s117 = sphi 0, %s116
      %s131 = sphi 0, %s117
      %s139 = sphi 0, %s141
      %s142 = sphi 0, %s139
      %s143 = sphi 0, %s142
      %s159 = sphi 0, %s143
      %s169 = sphi 0, %s171
      %s172 = sphi 0, %s169
      %s173 = sphi 0, %s172
      %s189 = sphi 0, %s173
    $region4: #{tpu_custom_call.1} parent=1 // loop_header_branch
      %17 = sbr.rel (%p15) target = $region8
    $region5: #{tpu_custom_call.1} parent=1 // loop_body
      %s19 = ssub.s32 %s14, 1
      %s20 = ssub.s32 %s14, 2
      %s30 = sadd.s32 1, %s23
      %p31 = scmp.ge.s32.totalorder %s30, 1
      %s32 = scalar_select %p31, 0, %s30
      %s33 = sadd.s32 1, %s22
      %s34 = scalar_select %p31, %s33, %s22
      %p35 = scmp.ge.s32.totalorder %s34, 1
      %s36 = scalar_select %p35, 0, %s34
      %s37 = sadd.s32 1, %s21
      %s38 = scalar_select %p35, %s37, %s21
      %p39 = scmp.ge.s32.totalorder %s38, 2
      %s40 = scalar_select %p39, 0, %s38
      %s41 = ssub.s32 %s21, %s40
      %p42 = scmp.eq.s32.totalorder %s41, 0
      %s44 = sadd.s32 %s43, 1
      %s45 = scalar_select %p42, %s43, %s44
      %p48 = pneg %p42
      %p49 = scmp.eq.s32.totalorder %s14, 1
      %p50 = por %p48, %p49
      %p51 = scmp.ne.s32.totalorder %s43, %s46
      %p52 = scmp.eq.s32.totalorder %s14, 0
      %p53 = por %p51, %p52
      %p54 = scmp.ne.s32.totalorder %s43, %s46
      %p55 = scmp.eq.s32.totalorder %s19, 1
      %p56 = por %p54, %p55
      %p57 = scmp.ne.s32.totalorder %s46, %s47
      %p58 = scmp.eq.s32.totalorder %s19, 0
      %p59 = por %p57, %p58
      %p60 = scmp.ne.s32.totalorder %s46, %s47
      %p61 = scmp.eq.s32.totalorder %s20, 1
      %p62 = por %p60, %p61
      %p64 = scmp.ne.s32.totalorder %s47, %s63
      %p65 = scmp.eq.s32.totalorder %s20, 0
      %p66 = por %p64, %p65
      %s67 = ssub.s32 %s21, %s40
      %p68 = scmp.eq.s32.totalorder %s67, 0
      %s70 = sadd.s32 %s69, 1
      %s71 = scalar_select %p68, %s69, %s70
      %p74 = pneg %p68
      %p75 = scmp.eq.s32.totalorder %s14, 1
      %p76 = por %p74, %p75
      %p77 = scmp.ne.s32.totalorder %s69, %s72
      %p78 = scmp.eq.s32.totalorder %s14, 0
      %p79 = por %p77, %p78
      %p80 = scmp.ne.s32.totalorder %s69, %s72
      %p81 = scmp.eq.s32.totalorder %s19, 1
      %p82 = por %p80, %p81
      %p83 = scmp.ne.s32.totalorder %s72, %s73
      %p84 = scmp.eq.s32.totalorder %s19, 0
      %p85 = por %p83, %p84
      %p86 = scmp.ne.s32.totalorder %s72, %s73
      %p87 = scmp.eq.s32.totalorder %s20, 1
      %p88 = por %p86, %p87
      %p90 = scmp.ne.s32.totalorder %s73, %s89
      %p91 = scmp.eq.s32.totalorder %s20, 0
      %p92 = por %p90, %p91
      %s94 = sadd.s32 %s93, 1
      %p97 = scmp.eq.s32.totalorder %s14, 1
      %p98 = scmp.ne.s32.totalorder %s93, %s95
      %p99 = scmp.eq.s32.totalorder %s14, 0
      %p100 = por %p98, %p99
      %p101 = scmp.ne.s32.totalorder %s93, %s95
      %p102 = scmp.eq.s32.totalorder %s19, 1
      %p103 = por %p101, %p102
      %p104 = scmp.ne.s32.totalorder %s95, %s96
      %p105 = scmp.eq.s32.totalorder %s19, 0
      %p106 = por %p104, %p105
      %p107 = scmp.ne.s32.totalorder %s95, %s96
      %p108 = scmp.eq.s32.totalorder %s20, 1
      %p109 = por %p107, %p108
      %p111 = scmp.ne.s32.totalorder %s96, %s110
      %p112 = scmp.eq.s32.totalorder %s20, 0
      %p113 = por %p111, %p112
      %s115 = sadd.s32 %s114, 1
      %p118 = scmp.eq.s32.totalorder %s14, 1
      %p119 = scmp.ne.s32.totalorder %s114, %s116
      %p120 = scmp.eq.s32.totalorder %s14, 0
      %p121 = por %p119, %p120
      %p122 = scmp.ne.s32.totalorder %s114, %s116
      %p123 = scmp.eq.s32.totalorder %s19, 1
      %p124 = por %p122, %p123
      %p125 = scmp.ne.s32.totalorder %s116, %s117
      %p126 = scmp.eq.s32.totalorder %s19, 0
      %p127 = por %p125, %p126
      %p128 = scmp.ne.s32.totalorder %s116, %s117
      %p129 = scmp.eq.s32.totalorder %s20, 1
      %p130 = por %p128, %p129
      %p132 = scmp.ne.s32.totalorder %s117, %s131
      %p133 = scmp.eq.s32.totalorder %s20, 0
      %p134 = por %p132, %p133
      %s135 = ssub.s32 %s22, %s36
      %s136 = ssub.s32 %s23, %s32
      %s137 = sor.u32 %s135, %s136
      %p138 = scmp.eq.s32.totalorder %s137, 0
      %s140 = sadd.s32 %s139, 1
      %s141 = scalar_select %p138, %s139, %s140
      %p144 = pneg %p138
      %p145 = scmp.eq.s32.totalorder %s14, 1
      %p146 = por %p144, %p145
      %p147 = scmp.ne.s32.totalorder %s139, %s142
      %p148 = scmp.eq.s32.totalorder %s14, 0
      %p149 = por %p147, %p148
      %p150 = scmp.ne.s32.totalorder %s139, %s142
      %p151 = scmp.eq.s32.totalorder %s19, 1
      %p152 = por %p150, %p151
      %p153 = scmp.ne.s32.totalorder %s142, %s143
      %p154 = scmp.eq.s32.totalorder %s19, 0
      %p155 = por %p153, %p154
      %p156 = scmp.ne.s32.totalorder %s142, %s143
      %p157 = scmp.eq.s32.totalorder %s20, 1
      %p158 = por %p156, %p157
      %p160 = scmp.ne.s32.totalorder %s143, %s159
      %p161 = scmp.eq.s32.totalorder %s20, 0
      %p162 = por %p160, %p161
      %s163 = ssub.s32 %s21, %s40
      %s164 = ssub.s32 %s22, %s36
      %s165 = sor.u32 %s163, %s164
      %s166 = ssub.s32 %s23, %s32
      %s167 = sor.u32 %s165, %s166
      %p168 = scmp.eq.s32.totalorder %s167, 0
      %s170 = sadd.s32 %s169, 1
      %s171 = scalar_select %p168, %s169, %s170
      %p174 = pneg %p168
      %p175 = scmp.eq.s32.totalorder %s14, 1
      %p176 = por %p174, %p175
      %p177 = scmp.ne.s32.totalorder %s169, %s172
      %p178 = scmp.eq.s32.totalorder %s14, 0
      %p179 = por %p177, %p178
      %p180 = scmp.ne.s32.totalorder %s169, %s172
      %p181 = scmp.eq.s32.totalorder %s19, 1
      %p182 = por %p180, %p181
      %p183 = scmp.ne.s32.totalorder %s172, %s173
      %p184 = scmp.eq.s32.totalorder %s19, 0
      %p185 = por %p183, %p184
      %p186 = scmp.ne.s32.totalorder %s172, %s173
      %p187 = scmp.eq.s32.totalorder %s20, 1
      %p188 = por %p186, %p187
      %p190 = scmp.ne.s32.totalorder %s173, %s189
      %p191 = scmp.eq.s32.totalorder %s20, 0
      %p192 = por %p190, %p191
      %p193 = scmp.le.s32.totalorder 1, %s14
      %p194 = scmp.lt.s32.totalorder %s14, 3
      %p195 = pnand %p193, %p194
      %p196 = pneg %p195
      // Predicated region
      $region9: #{tpu_custom_call.1} parent=5 // pred_check
        _
      $region10: #{tpu_custom_call.1} parent=5 // pred_check_branch
        %198 = sbr.rel (%p195) target = $region12
      $region11: #{tpu_custom_call.1} parent=5 // pred_region
        %s199 = ssub.s32 %s14, 1
        // Predicated region
        $region13: #{tpu_custom_call.1} parent=11 // pred_check
          %p200 = pneg %p106
        $region14: #{tpu_custom_call.1} parent=11 // pred_check_branch
          %202 = sbr.rel (%p200) target = $region16
        $region15: #{tpu_custom_call.1} parent=11 // pred_region
          _
        $region16: #{tpu_custom_call.1} parent=11 // pred_fallthru
          _
        // Predicated region
        $region17: #{tpu_custom_call.1} parent=11 // pred_check
          %p203 = pneg %p127
        $region18: #{tpu_custom_call.1} parent=11 // pred_check_branch
          %205 = sbr.rel (%p203) target = $region20
        $region19: #{tpu_custom_call.1} parent=11 // pred_region
          _
        $region20: #{tpu_custom_call.1} parent=11 // pred_fallthru
          _
        // Predicated region
        $region21: #{tpu_custom_call.1} parent=11 // pred_check
          %p206 = pneg %p155
        $region22: #{tpu_custom_call.1} parent=11 // pred_check_branch
          %208 = sbr.rel (%p206) target = $region24
        $region23: #{tpu_custom_call.1} parent=11 // pred_region
          %s209 = smul.u32 16, %s25
          %s210 = smul.u32 2, %s26
          %p211 = scmp.lt.s32.totalorder %s209, 15
          %s212 = scalar_select %p211, %s209, 15
          %p213 = scmp.lt.s32.totalorder %s210, 1
          %s214 = scalar_select %p213, %s210, 1
          %s215 = smul.addr %s212, 2
          %s216 = sadd.s32 %s214, %s215
          %s217 = smul.addr %s216, 8
          %s218 = scalar_lea.vmem %s4, %s217
          %s219 = smul.u32 16, %s25
          %s220 = smul.u32 2, %s26
        $region24: #{tpu_custom_call.1} parent=11 // pred_fallthru
          _
      $region12: #{tpu_custom_call.1} parent=5 // pred_fallthru
        _
      %p221 = scmp.lt.s32.totalorder %s14, 2
      // Predicated region
      $region25: #{tpu_custom_call.1} parent=5 // pred_check
        %p222 = pneg %p221
      $region26: #{tpu_custom_call.1} parent=5 // pred_check_branch
        %224 = sbr.rel (%p222) target = $region28
      $region27: #{tpu_custom_call.1} parent=5 // pred_region
        // Predicated region
        $region29: #{tpu_custom_call.1} parent=27 // pred_check
          %p225 = pneg %p53
        $region30: #{tpu_custom_call.1} parent=27 // pred_check_branch
          %227 = sbr.rel (%p225) target = $region32
        $region31: #{tpu_custom_call.1} parent=27 // pred_region
          %p228 = scmp.lt.s32.totalorder %s21, 1
          %s229 = scalar_select %p228, %s21, 1
          %s230 = smul.addr %s229, 2
          %s231 = smul.addr %s230, 8
          %s232 = scalar_lea.vmem %s0, %s231
        $region32: #{tpu_custom_call.1} parent=27 // pred_fallthru
          _
        // Predicated region
        $region33: #{tpu_custom_call.1} parent=27 // pred_check
          %p233 = pneg %p79
        $region34: #{tpu_custom_call.1} parent=27 // pred_check_branch
          %235 = sbr.rel (%p233) target = $region36
        $region35: #{tpu_custom_call.1} parent=27 // pred_region
          %p236 = scmp.lt.s32.totalorder %s21, 1
          %s237 = scalar_select %p236, %s21, 1
          %s238 = smul.addr %s237, 2
          %s239 = smul.addr %s238, 8
          %s240 = scalar_lea.vmem %s1, %s239
        $region36: #{tpu_custom_call.1} parent=27 // pred_fallthru
          _
      $region28: #{tpu_custom_call.1} parent=5 // pred_fallthru
        _
      %p241 = scmp.le.s32.totalorder 1, %s14
      %p242 = scmp.lt.s32.totalorder %s14, 3
      %p243 = pnand %p241, %p242
      %p244 = pneg %p243
      // Predicated region
      $region37: #{tpu_custom_call.1} parent=5 // pred_check
        _
      $region38: #{tpu_custom_call.1} parent=5 // pred_check_branch
        %246 = sbr.rel (%p243) target = $region40
      $region39: #{tpu_custom_call.1} parent=5 // pred_region
        %s247 = ssub.s32 %s14, 1
        %p248 = scmp.lt.s32.totalorder %s24, 1
        %s249 = scalar_select %p248, %s24, 1
        %s250 = smul.addr %s249, 2
        %s251 = smul.addr %s250, 8
        %s252 = scalar_lea.vmem %s0, %s251
        %p253 = pneg %p59
        %p254 = pneg %p56
        %p255 = scmp.lt.s32.totalorder %s24, 1
        %s256 = scalar_select %p255, %s24, 1
        %s257 = smul.addr %s256, 2
        %s258 = smul.addr %s257, 8
        %s259 = scalar_lea.vmem %s1, %s258
        %p260 = pneg %p85
        %p261 = pneg %p82
        %p262 = pneg %p106
        %p263 = pneg %p103
        %p264 = pneg %p127
        %p265 = pneg %p124
        %s266 = smul.u32 16, %s25
        %s267 = smul.u32 2, %s26
        %p268 = scmp.lt.s32.totalorder %s266, 15
        %s269 = scalar_select %p268, %s266, 15
        %p270 = scmp.lt.s32.totalorder %s267, 1
        %s271 = scalar_select %p270, %s267, 1
        %s272 = smul.addr %s269, 2
        %s273 = sadd.s32 %s271, %s272
        %s274 = smul.addr %s273, 8
        %s275 = scalar_lea.vmem %s4, %s274
        %p276 = pneg %p155
        %p277 = pneg %p152
        %p278 = pneg %p185
        %p279 = pneg %p182
        %s280 = sand.u32 %s172, 1
        %s281 = scalar_lea.sflag [#allocation3], %s280
        %s282 = sand.u32 %s172, 1
        %s283 = smul.addr %s282, 256
        %s284 = scalar_lea.vmem [#allocation2], %s283
        %p285 = scmp.lt.s32.totalorder %s24, 1
        %s286 = scalar_select %p285, %s24, 1
        %s287 = smul.addr %s286, 2
        %s288 = smul.addr %s287, 8
        %s289 = scalar_lea.vmem %s0, %s288
        %p290 = scmp.lt.s32.totalorder %s24, 1
        %s291 = scalar_select %p290, %s24, 1
        %s292 = smul.addr %s291, 2
        %s293 = smul.addr %s292, 8
        %s294 = scalar_lea.vmem %s1, %s293
        %s295 = smul.u32 16, %s25
        %s296 = smul.u32 2, %s26
        %p297 = scmp.lt.s32.totalorder %s295, 15
        %s298 = scalar_select %p297, %s295, 15
        %p299 = scmp.lt.s32.totalorder %s296, 1
        %s300 = scalar_select %p299, %s296, 1
        %s301 = smul.addr %s298, 2
        %s302 = sadd.s32 %s300, %s301
        %s303 = smul.addr %s302, 8
        %s304 = scalar_lea.vmem %s4, %s303
        %s305 = smul.u32 16, %s25
        %s306 = smul.u32 2, %s26
        %s307 = smul.u32 16, %s25
        %s308 = smul.u32 2, %s26
        %s309 = smul.u32 %s25, 16
        %s310 = smul.u32 %s26, 16
        %s311 = scalar_lea.vmem %s294, %s309
        %v312 = vld [vmem:[%s311] sm:$0xff]
        %v313 = vld [vmem:[%s311 + $0x8] sm:$0xff]
        %s314 = scalar_lea.vmem %s289, %s310
        %v315 = vld [vmem:[%s314] sm:$0xff]
        %v316 = vld [vmem:[%s314 + $0x8] sm:$0xff]
        %v319 = vcombine.high %v312, %v312
        %v321 = vunpack.c.l.s4 1966171168
        %v322 = vunpack.c.0.s8 %v321
        %v323 = vlaneseq
        %v324 = vshrl.u32 %v323, 7
        %v325 = vsub.s32 %v322, %v324
        %v326 = vrot.slane %v312, %v325
        %v328 = vunpack.c.l.s4 1966171168
        %v329 = vunpack.c.0.s8 %v328
        %v330 = vlaneseq
        %v331 = vshrl.u32 %v330, 7
        %v332 = vsub.s32 %v329, %v331
        %v333 = vrot.slane %v319, %v332
        %v334 = vcombine.high %v326, %v326
        %v335 = vcombine.high %v333, %v333
        %v337 = vunpack.c.l.s4 1966171168
        %v338 = vunpack.c.0.s8 %v337
        %v339 = vlaneseq
        %v340 = vshrl.u32 %v339, 7
        %v341 = vsub.s32 %v338, %v340
        %v342 = vrot.slane %v326, %v341
        %v344 = vunpack.c.l.s4 1966171168
        %v345 = vunpack.c.0.s8 %v344
        %v346 = vlaneseq
        %v347 = vshrl.u32 %v346, 7
        %v348 = vsub.s32 %v345, %v347
        %v349 = vrot.slane %v333, %v348
        %v351 = vunpack.c.l.s4 1966171168
        %v352 = vunpack.c.0.s8 %v351
        %v353 = vlaneseq
        %v354 = vshrl.u32 %v353, 7
        %v355 = vsub.s32 %v352, %v354
        %v356 = vrot.slane %v334, %v355
        %v358 = vunpack.c.l.s4 1966171168
        %v359 = vunpack.c.0.s8 %v358
        %v360 = vlaneseq
        %v361 = vshrl.u32 %v360, 7
        %v362 = vsub.s32 %v359, %v361
        %v363 = vrot.slane %v335, %v362
        %v364 = vcombine.high %v342, %v342
        %v365 = vcombine.high %v349, %v349
        %v366 = vcombine.high %v356, %v356
        %v367 = vcombine.high %v363, %v363
        %v368 = vcombine.high %v313, %v313
        %v370 = vunpack.c.l.s4 1966171168
        %v371 = vunpack.c.0.s8 %v370
        %v372 = vlaneseq
        %v373 = vshrl.u32 %v372, 7
        %v374 = vsub.s32 %v371, %v373
        %v375 = vrot.slane %v313, %v374
        %v377 = vunpack.c.l.s4 1966171168
        %v378 = vunpack.c.0.s8 %v377
        %v379 = vlaneseq
        %v380 = vshrl.u32 %v379, 7
        %v381 = vsub.s32 %v378, %v380
        %v382 = vrot.slane %v368, %v381
        %v383 = vcombine.high %v375, %v375
        %v384 = vcombine.high %v382, %v382
        %v386 = vunpack.c.l.s4 1966171168
        %v387 = vunpack.c.0.s8 %v386
        %v388 = vlaneseq
        %v389 = vshrl.u32 %v388, 7
        %v390 = vsub.s32 %v387, %v389
        %v391 = vrot.slane %v375, %v390
        %v393 = vunpack.c.l.s4 1966171168
        %v394 = vunpack.c.0.s8 %v393
        %v395 = vlaneseq
        %v396 = vshrl.u32 %v395, 7
        %v397 = vsub.s32 %v394, %v396
        %v398 = vrot.slane %v382, %v397
        %v400 = vunpack.c.l.s4 1966171168
        %v401 = vunpack.c.0.s8 %v400
        %v402 = vlaneseq
        %v403 = vshrl.u32 %v402, 7
        %v404 = vsub.s32 %v401, %v403
        %v405 = vrot.slane %v383, %v404
        %v407 = vunpack.c.l.s4 1966171168
        %v408 = vunpack.c.0.s8 %v407
        %v409 = vlaneseq
        %v410 = vshrl.u32 %v409, 7
        %v411 = vsub.s32 %v408, %v410
        %v412 = vrot.slane %v384, %v411
        %v413 = vcombine.high %v391, %v391
        %v414 = vcombine.high %v398, %v398
        %v415 = vcombine.high %v405, %v405
        %v416 = vcombine.high %v412, %v412
        %v417 = vlaneseq
        %v418 = vshrl.u32 %v417, 7
        %v419 = vsub.s32 0, %v418
        %v420 = vrot.slane %v342, %v419
        %v421 = vlaneseq
        %v422 = vshrl.u32 %v421, 7
        %v423 = vsub.s32 0, %v422
        %v424 = vrot.slane %v356, %v423
        %v425 = vlaneseq
        %v426 = vshrl.u32 %v425, 7
        %v427 = vsub.s32 0, %v426
        %v428 = vrot.slane %v364, %v427
        %v429 = vlaneseq
        %v430 = vshrl.u32 %v429, 7
        %v431 = vsub.s32 0, %v430
        %v432 = vrot.slane %v366, %v431
        %v433 = vlaneseq
        %v434 = vshrl.u32 %v433, 7
        %v435 = vsub.s32 0, %v434
        %v436 = vrot.slane %v349, %v435
        %v437 = vlaneseq
        %v438 = vshrl.u32 %v437, 7
        %v439 = vsub.s32 0, %v438
        %v440 = vrot.slane %v363, %v439
        %v441 = vlaneseq
        %v442 = vshrl.u32 %v441, 7
        %v443 = vsub.s32 0, %v442
        %v444 = vrot.slane %v365, %v443
        %v445 = vlaneseq
        %v446 = vshrl.u32 %v445, 7
        %v447 = vsub.s32 0, %v446
        %v448 = vrot.slane %v367, %v447
        %v449 = vlaneseq
        %v450 = vshrl.u32 %v449, 7
        %v451 = vsub.s32 0, %v450
        %v452 = vrot.slane %v391, %v451
        %v453 = vlaneseq
        %v454 = vshrl.u32 %v453, 7
        %v455 = vsub.s32 0, %v454
        %v456 = vrot.slane %v405, %v455
        %v457 = vlaneseq
        %v458 = vshrl.u32 %v457, 7
        %v459 = vsub.s32 0, %v458
        %v460 = vrot.slane %v413, %v459
        %v461 = vlaneseq
        %v462 = vshrl.u32 %v461, 7
        %v463 = vsub.s32 0, %v462
        %v464 = vrot.slane %v415, %v463
        %v465 = vlaneseq
        %v466 = vshrl.u32 %v465, 7
        %v467 = vsub.s32 0, %v466
        %v468 = vrot.slane %v398, %v467
        %v469 = vlaneseq
        %v470 = vshrl.u32 %v469, 7
        %v471 = vsub.s32 0, %v470
        %v472 = vrot.slane %v412, %v471
        %v473 = vlaneseq
        %v474 = vshrl.u32 %v473, 7
        %v475 = vsub.s32 0, %v474
        %v476 = vrot.slane %v414, %v475
        %v477 = vlaneseq
        %v478 = vshrl.u32 %v477, 7
        %v479 = vsub.s32 0, %v478
        %v480 = vrot.slane %v416, %v479
        %v497 = vadd.f32 %v420, %v315
        %v498 = vadd.f32 %v420, %v316
        %v499 = vadd.f32 %v424, %v315
        %v500 = vadd.f32 %v424, %v316
        %v501 = vadd.f32 %v428, %v315
        %v502 = vadd.f32 %v428, %v316
        %v503 = vadd.f32 %v432, %v315
        %v504 = vadd.f32 %v432, %v316
        %v505 = vadd.f32 %v436, %v315
        %v506 = vadd.f32 %v436, %v316
        %v507 = vadd.f32 %v440, %v315
        %v508 = vadd.f32 %v440, %v316
        %v509 = vadd.f32 %v444, %v315
        %v510 = vadd.f32 %v444, %v316
        %v511 = vadd.f32 %v448, %v315
        %v512 = vadd.f32 %v448, %v316
        %v513 = vadd.f32 %v452, %v315
        %v514 = vadd.f32 %v452, %v316
        %v515 = vadd.f32 %v456, %v315
        %v516 = vadd.f32 %v456, %v316
        %v517 = vadd.f32 %v460, %v315
        %v518 = vadd.f32 %v460, %v316
        %v519 = vadd.f32 %v464, %v315
        %v520 = vadd.f32 %v464, %v316
        %v521 = vadd.f32 %v468, %v315
        %v522 = vadd.f32 %v468, %v316
        %v523 = vadd.f32 %v472, %v315
        %v524 = vadd.f32 %v472, %v316
        %v525 = vadd.f32 %v476, %v315
        %v526 = vadd.f32 %v476, %v316
        %v527 = vadd.f32 %v480, %v315
        %v528 = vadd.f32 %v480, %v316
        %v529 = vmul.f32 %v497, %v497
        %v530 = vmul.f32 %v498, %v498
        %v531 = vmul.f32 %v499, %v499
        %v532 = vmul.f32 %v500, %v500
        %v533 = vmul.f32 %v501, %v501
        %v534 = vmul.f32 %v502, %v502
        %v535 = vmul.f32 %v503, %v503
        %v536 = vmul.f32 %v504, %v504
        %v537 = vmul.f32 %v505, %v505
        %v538 = vmul.f32 %v506, %v506
        %v539 = vmul.f32 %v507, %v507
        %v540 = vmul.f32 %v508, %v508
        %v541 = vmul.f32 %v509, %v509
        %v542 = vmul.f32 %v510, %v510
        %v543 = vmul.f32 %v511, %v511
        %v544 = vmul.f32 %v512, %v512
        %v545 = vmul.f32 %v513, %v513
        %v546 = vmul.f32 %v514, %v514
        %v547 = vmul.f32 %v515, %v515
        %v548 = vmul.f32 %v516, %v516
        %v549 = vmul.f32 %v517, %v517
        %v550 = vmul.f32 %v518, %v518
        %v551 = vmul.f32 %v519, %v519
        %v552 = vmul.f32 %v520, %v520
        %v553 = vmul.f32 %v521, %v521
        %v554 = vmul.f32 %v522, %v522
        %v555 = vmul.f32 %v523, %v523
        %v556 = vmul.f32 %v524, %v524
        %v557 = vmul.f32 %v525, %v525
        %v558 = vmul.f32 %v526, %v526
        %v559 = vmul.f32 %v527, %v527
        %v560 = vmul.f32 %v528, %v528
        %vm561 = vcmask 261120
        %v562 = vsel %vm561, %v529, 0.0
        %563 = vadd.xlane.f32.xlu0 %v562
        %v564 = vpop.xlane.xlu0 %563
        %v565 = vsel %vm561, %v530, 0.0
        %566 = vadd.xlane.f32.xlu0 %v565
        %v567 = vpop.xlane.xlu0 %566
        %v568 = vsel %vm561, %v531, 0.0
        %569 = vadd.xlane.f32.xlu0 %v568
        %v570 = vpop.xlane.xlu0 %569
        %v571 = vsel %vm561, %v532, 0.0
        %572 = vadd.xlane.f32.xlu0 %v571
        %v573 = vpop.xlane.xlu0 %572
        %v574 = vsel %vm561, %v533, 0.0
        %575 = vadd.xlane.f32.xlu0 %v574
        %v576 = vpop.xlane.xlu0 %575
        %v577 = vsel %vm561, %v534, 0.0
        %578 = vadd.xlane.f32.xlu0 %v577
        %v579 = vpop.xlane.xlu0 %578
        %v580 = vsel %vm561, %v535, 0.0
        %581 = vadd.xlane.f32.xlu0 %v580
        %v582 = vpop.xlane.xlu0 %581
        %v583 = vsel %vm561, %v536, 0.0
        %584 = vadd.xlane.f32.xlu0 %v583
        %v585 = vpop.xlane.xlu0 %584
        %v586 = vsel %vm561, %v537, 0.0
        %587 = vadd.xlane.f32.xlu0 %v586
        %v588 = vpop.xlane.xlu0 %587
        %v589 = vsel %vm561, %v538, 0.0
        %590 = vadd.xlane.f32.xlu0 %v589
        %v591 = vpop.xlane.xlu0 %590
        %v592 = vsel %vm561, %v539, 0.0
        %593 = vadd.xlane.f32.xlu0 %v592
        %v594 = vpop.xlane.xlu0 %593
        %v595 = vsel %vm561, %v540, 0.0
        %596 = vadd.xlane.f32.xlu0 %v595
        %v597 = vpop.xlane.xlu0 %596
        %v598 = vsel %vm561, %v541, 0.0
        %599 = vadd.xlane.f32.xlu0 %v598
        %v600 = vpop.xlane.xlu0 %599
        %v601 = vsel %vm561, %v542, 0.0
        %602 = vadd.xlane.f32.xlu0 %v601
        %v603 = vpop.xlane.xlu0 %602
        %v604 = vsel %vm561, %v543, 0.0
        %605 = vadd.xlane.f32.xlu0 %v604
        %v606 = vpop.xlane.xlu0 %605
        %v607 = vsel %vm561, %v544, 0.0
        %608 = vadd.xlane.f32.xlu0 %v607
        %v609 = vpop.xlane.xlu0 %608
        %v610 = vsel %vm561, %v545, 0.0
        %611 = vadd.xlane.f32.xlu0 %v610
        %v612 = vpop.xlane.xlu0 %611
        %v613 = vsel %vm561, %v546, 0.0
        %614 = vadd.xlane.f32.xlu0 %v613
        %v615 = vpop.xlane.xlu0 %614
        %v616 = vsel %vm561, %v547, 0.0
        %617 = vadd.xlane.f32.xlu0 %v616
        %v618 = vpop.xlane.xlu0 %617
        %v619 = vsel %vm561, %v548, 0.0
        %620 = vadd.xlane.f32.xlu0 %v619
        %v621 = vpop.xlane.xlu0 %620
        %v622 = vsel %vm561, %v549, 0.0
        %623 = vadd.xlane.f32.xlu0 %v622
        %v624 = vpop.xlane.xlu0 %623
        %v625 = vsel %vm561, %v550, 0.0
        %626 = vadd.xlane.f32.xlu0 %v625
        %v627 = vpop.xlane.xlu0 %626
        %v628 = vsel %vm561, %v551, 0.0
        %629 = vadd.xlane.f32.xlu0 %v628
        %v630 = vpop.xlane.xlu0 %629
        %v631 = vsel %vm561, %v552, 0.0
        %632 = vadd.xlane.f32.xlu0 %v631
        %v633 = vpop.xlane.xlu0 %632
        %v634 = vsel %vm561, %v553, 0.0
        %635 = vadd.xlane.f32.xlu0 %v634
        %v636 = vpop.xlane.xlu0 %635
        %v637 = vsel %vm561, %v554, 0.0
        %638 = vadd.xlane.f32.xlu0 %v637
        %v639 = vpop.xlane.xlu0 %638
        %v640 = vsel %vm561, %v555, 0.0
        %641 = vadd.xlane.f32.xlu0 %v640
        %v642 = vpop.xlane.xlu0 %641
        %v643 = vsel %vm561, %v556, 0.0
        %644 = vadd.xlane.f32.xlu0 %v643
        %v645 = vpop.xlane.xlu0 %644
        %v646 = vsel %vm561, %v557, 0.0
        %647 = vadd.xlane.f32.xlu0 %v646
        %v648 = vpop.xlane.xlu0 %647
        %v649 = vsel %vm561, %v558, 0.0
        %650 = vadd.xlane.f32.xlu0 %v649
        %v651 = vpop.xlane.xlu0 %650
        %v652 = vsel %vm561, %v559, 0.0
        %653 = vadd.xlane.f32.xlu0 %v652
        %v654 = vpop.xlane.xlu0 %653
        %v655 = vsel %vm561, %v560, 0.0
        %656 = vadd.xlane.f32.xlu0 %v655
        %v657 = vpop.xlane.xlu0 %656
        %v658 = vrcp.pop 32.0
        %v659 = vmul.f32 %v564, %v658
        %v660 = vmul.f32 %v567, %v658
        %v661 = vmul.f32 %v570, %v658
        %v662 = vmul.f32 %v573, %v658
        %v663 = vmul.f32 %v576, %v658
        %v664 = vmul.f32 %v579, %v658
        %v665 = vmul.f32 %v582, %v658
        %v666 = vmul.f32 %v585, %v658
        %v667 = vmul.f32 %v588, %v658
        %v668 = vmul.f32 %v591, %v658
        %v669 = vmul.f32 %v594, %v658
        %v670 = vmul.f32 %v597, %v658
        %v671 = vmul.f32 %v600, %v658
        %v672 = vmul.f32 %v603, %v658
        %v673 = vmul.f32 %v606, %v658
        %v674 = vmul.f32 %v609, %v658
        %v675 = vmul.f32 %v612, %v658
        %v676 = vmul.f32 %v615, %v658
        %v677 = vmul.f32 %v618, %v658
        %v678 = vmul.f32 %v621, %v658
        %v679 = vmul.f32 %v624, %v658
        %v680 = vmul.f32 %v627, %v658
        %v681 = vmul.f32 %v630, %v658
        %v682 = vmul.f32 %v633, %v658
        %v683 = vmul.f32 %v636, %v658
        %v684 = vmul.f32 %v639, %v658
        %v685 = vmul.f32 %v642, %v658
        %v686 = vmul.f32 %v645, %v658
        %v687 = vmul.f32 %v648, %v658
        %v688 = vmul.f32 %v651, %v658
        %v689 = vmul.f32 %v654, %v658
        %v690 = vmul.f32 %v657, %v658
        %v691 = vadd.f32 %v659, 1e-05
        %v692 = vadd.f32 %v660, 1e-05
        %v693 = vadd.f32 %v661, 1e-05
        %v694 = vadd.f32 %v662, 1e-05
        %v695 = vadd.f32 %v663, 1e-05
        %v696 = vadd.f32 %v664, 1e-05
        %v697 = vadd.f32 %v665, 1e-05
        %v698 = vadd.f32 %v666, 1e-05
        %v699 = vadd.f32 %v667, 1e-05
        %v700 = vadd.f32 %v668, 1e-05
        %v701 = vadd.f32 %v669, 1e-05
        %v702 = vadd.f32 %v670, 1e-05
        %v703 = vadd.f32 %v671, 1e-05
        %v704 = vadd.f32 %v672, 1e-05
        %v705 = vadd.f32 %v673, 1e-05
        %v706 = vadd.f32 %v674, 1e-05
        %v707 = vadd.f32 %v675, 1e-05
        %v708 = vadd.f32 %v676, 1e-05
        %v709 = vadd.f32 %v677, 1e-05
        %v710 = vadd.f32 %v678, 1e-05
        %v711 = vadd.f32 %v679, 1e-05
        %v712 = vadd.f32 %v680, 1e-05
        %v713 = vadd.f32 %v681, 1e-05
        %v714 = vadd.f32 %v682, 1e-05
        %v715 = vadd.f32 %v683, 1e-05
        %v716 = vadd.f32 %v684, 1e-05
        %v717 = vadd.f32 %v685, 1e-05
        %v718 = vadd.f32 %v686, 1e-05
        %v719 = vadd.f32 %v687, 1e-05
        %v720 = vadd.f32 %v688, 1e-05
        %v721 = vadd.f32 %v689, 1e-05
        %v722 = vadd.f32 %v690, 1e-05
        %v723 = vrsqrt.pop %v691
        %v724 = vrsqrt.pop %v692
        %v725 = vrsqrt.pop %v693
        %v726 = vrsqrt.pop %v694
        %v727 = vrsqrt.pop %v695
        %v728 = vrsqrt.pop %v696
        %v729 = vrsqrt.pop %v697
        %v730 = vrsqrt.pop %v698
        %v731 = vrsqrt.pop %v699
        %v732 = vrsqrt.pop %v700
        %v733 = vrsqrt.pop %v701
        %v734 = vrsqrt.pop %v702
        %v735 = vrsqrt.pop %v703
        %v736 = vrsqrt.pop %v704
        %v737 = vrsqrt.pop %v705
        %v738 = vrsqrt.pop %v706
        %v739 = vrsqrt.pop %v707
        %v740 = vrsqrt.pop %v708
        %v741 = vrsqrt.pop %v709
        %v742 = vrsqrt.pop %v710
        %v743 = vrsqrt.pop %v711
        %v744 = vrsqrt.pop %v712
        %v745 = vrsqrt.pop %v713
        %v746 = vrsqrt.pop %v714
        %v747 = vrsqrt.pop %v715
        %v748 = vrsqrt.pop %v716
        %v749 = vrsqrt.pop %v717
        %v750 = vrsqrt.pop %v718
        %v751 = vrsqrt.pop %v719
        %v752 = vrsqrt.pop %v720
        %v753 = vrsqrt.pop %v721
        %v754 = vrsqrt.pop %v722
        %v755 = vmul.f32 %v497, %v723
        %v756 = vmul.f32 %v498, %v724
        %v757 = vmul.f32 %v499, %v725
        %v758 = vmul.f32 %v500, %v726
        %v759 = vmul.f32 %v501, %v727
        %v760 = vmul.f32 %v502, %v728
        %v761 = vmul.f32 %v503, %v729
        %v762 = vmul.f32 %v504, %v730
        %v763 = vmul.f32 %v505, %v731
        %v764 = vmul.f32 %v506, %v732
        %v765 = vmul.f32 %v507, %v733
        %v766 = vmul.f32 %v508, %v734
        %v767 = vmul.f32 %v509, %v735
        %v768 = vmul.f32 %v510, %v736
        %v769 = vmul.f32 %v511, %v737
        %v770 = vmul.f32 %v512, %v738
        %v771 = vmul.f32 %v513, %v739
        %v772 = vmul.f32 %v514, %v740
        %v773 = vmul.f32 %v515, %v741
        %v774 = vmul.f32 %v516, %v742
        %v775 = vmul.f32 %v517, %v743
        %v776 = vmul.f32 %v518, %v744
        %v777 = vmul.f32 %v519, %v745
        %v778 = vmul.f32 %v520, %v746
        %v779 = vmul.f32 %v521, %v747
        %v780 = vmul.f32 %v522, %v748
        %v781 = vmul.f32 %v523, %v749
        %v782 = vmul.f32 %v524, %v750
        %v783 = vmul.f32 %v525, %v751
        %v784 = vmul.f32 %v526, %v752
        %v785 = vmul.f32 %v527, %v753
        %v786 = vmul.f32 %v528, %v754
        %v787 = vld [vmem:[%s2] sm:$0x1]
        %v789 = vlaneseq
        %v790 = vshrl.u32 %v789, 7
        %v791 = vsub.s32 0, %v790
        %v792 = vrot.slane %v787, %v791
        %v794 = vmul.f32 %v755, %v792
        %v795 = vmul.f32 %v756, %v792
        %v796 = vmul.f32 %v757, %v792
        %v797 = vmul.f32 %v758, %v792
        %v798 = vmul.f32 %v759, %v792
        %v799 = vmul.f32 %v760, %v792
        %v800 = vmul.f32 %v761, %v792
        %v801 = vmul.f32 %v762, %v792
        %v802 = vmul.f32 %v763, %v792
        %v803 = vmul.f32 %v764, %v792
        %v804 = vmul.f32 %v765, %v792
        %v805 = vmul.f32 %v766, %v792
        %v806 = vmul.f32 %v767, %v792
        %v807 = vmul.f32 %v768, %v792
        %v808 = vmul.f32 %v769, %v792
        %v809 = vmul.f32 %v770, %v792
        %v810 = vmul.f32 %v771, %v792
        %v811 = vmul.f32 %v772, %v792
        %v812 = vmul.f32 %v773, %v792
        %v813 = vmul.f32 %v774, %v792
        %v814 = vmul.f32 %v775, %v792
        %v815 = vmul.f32 %v776, %v792
        %v816 = vmul.f32 %v777, %v792
        %v817 = vmul.f32 %v778, %v792
        %v818 = vmul.f32 %v779, %v792
        %v819 = vmul.f32 %v780, %v792
        %v820 = vmul.f32 %v781, %v792
        %v821 = vmul.f32 %v782, %v792
        %v822 = vmul.f32 %v783, %v792
        %v823 = vmul.f32 %v784, %v792
        %v824 = vmul.f32 %v785, %v792
        %v825 = vmul.f32 %v786, %v792
        %v826 = vld [vmem:[%s3] sm:$0x1]
        %v828 = vlaneseq
        %v829 = vshrl.u32 %v828, 7
        %v830 = vsub.s32 0, %v829
        %v831 = vrot.slane %v826, %v830
        %v833 = vadd.f32 %v794, %v831
        %v834 = vadd.f32 %v795, %v831
        %v835 = vadd.f32 %v796, %v831
        %v836 = vadd.f32 %v797, %v831
        %v837 = vadd.f32 %v798, %v831
        %v838 = vadd.f32 %v799, %v831
        %v839 = vadd.f32 %v800, %v831
        %v840 = vadd.f32 %v801, %v831
        %v841 = vadd.f32 %v802, %v831
        %v842 = vadd.f32 %v803, %v831
        %v843 = vadd.f32 %v804, %v831
        %v844 = vadd.f32 %v805, %v831
        %v845 = vadd.f32 %v806, %v831
        %v846 = vadd.f32 %v807, %v831
        %v847 = vadd.f32 %v808, %v831
        %v848 = vadd.f32 %v809, %v831
        %v849 = vadd.f32 %v810, %v831
        %v850 = vadd.f32 %v811, %v831
        %v851 = vadd.f32 %v812, %v831
        %v852 = vadd.f32 %v813, %v831
        %v853 = vadd.f32 %v814, %v831
        %v854 = vadd.f32 %v815, %v831
        %v855 = vadd.f32 %v816, %v831
        %v856 = vadd.f32 %v817, %v831
        %v857 = vadd.f32 %v818, %v831
        %v858 = vadd.f32 %v819, %v831
        %v859 = vadd.f32 %v820, %v831
        %v860 = vadd.f32 %v821, %v831
        %v861 = vadd.f32 %v822, %v831
        %v862 = vadd.f32 %v823, %v831
        %v863 = vadd.f32 %v824, %v831
        %v864 = vadd.f32 %v825, %v831
        %v865 = vlaneseq
        %v866 = vand.u32 %v865, 127
        %p867 = scmp.lt.s32.totalorder %s24, 2
        %vm868 = vcmp.eq.s32.totalorder %v866, 0
        %s869 = scalar_select %p867, 1, 0
        %v870 = vstv %s869
        %vm871 = vcmp.eq.s32.totalorder %v870, 1
        %vm872 = vmand %vm871, %vm868
        %v873 = vld [vmem:[%s304] sm:$0xff]
        %v874 = vld [vmem:[%s304 + $0x8] sm:$0xff]
        %v875 = vld [vmem:[%s304 + $0x10] sm:$0xff]
        %v876 = vld [vmem:[%s304 + $0x18] sm:$0xff]
        %v877 = vld [vmem:[%s304 + $0x20] sm:$0xff]
        %v878 = vld [vmem:[%s304 + $0x28] sm:$0xff]
        %v879 = vld [vmem:[%s304 + $0x30] sm:$0xff]
        %v880 = vld [vmem:[%s304 + $0x38] sm:$0xff]
        %v881 = vld [vmem:[%s304 + $0x40] sm:$0xff]
        %v882 = vld [vmem:[%s304 + $0x48] sm:$0xff]
        %v883 = vld [vmem:[%s304 + $0x50] sm:$0xff]
        %v884 = vld [vmem:[%s304 + $0x58] sm:$0xff]
        %v885 = vld [vmem:[%s304 + $0x60] sm:$0xff]
        %v886 = vld [vmem:[%s304 + $0x68] sm:$0xff]
        %v887 = vld [vmem:[%s304 + $0x70] sm:$0xff]
        %v888 = vld [vmem:[%s304 + $0x78] sm:$0xff]
        %v889 = vld [vmem:[%s304 + $0x80] sm:$0xff]
        %v890 = vld [vmem:[%s304 + $0x88] sm:$0xff]
        %v891 = vld [vmem:[%s304 + $0x90] sm:$0xff]
        %v892 = vld [vmem:[%s304 + $0x98] sm:$0xff]
        %v893 = vld [vmem:[%s304 + $0xa0] sm:$0xff]
        %v894 = vld [vmem:[%s304 + $0xa8] sm:$0xff]
        %v895 = vld [vmem:[%s304 + $0xb0] sm:$0xff]
        %v896 = vld [vmem:[%s304 + $0xb8] sm:$0xff]
        %v897 = vld [vmem:[%s304 + $0xc0] sm:$0xff]
        %v898 = vld [vmem:[%s304 + $0xc8] sm:$0xff]
        %v899 = vld [vmem:[%s304 + $0xd0] sm:$0xff]
        %v900 = vld [vmem:[%s304 + $0xd8] sm:$0xff]
        %v901 = vld [vmem:[%s304 + $0xe0] sm:$0xff]
        %v902 = vld [vmem:[%s304 + $0xe8] sm:$0xff]
        %v903 = vld [vmem:[%s304 + $0xf0] sm:$0xff]
        %v904 = vld [vmem:[%s304 + $0xf8] sm:$0xff]
        %906 = vset.pattern.permute.xlu0 0
        %907 = vperm.xlu0 %906, %v873
        %v908 = vpop.permute.xlu0 %907
        %911 = vset.pattern.permute.xlu0 0
        %912 = vperm.xlu0 %911, %v874
        %v913 = vpop.permute.xlu0 %912
        %916 = vset.pattern.permute.xlu0 0
        %917 = vperm.xlu0 %916, %v875
        %v918 = vpop.permute.xlu0 %917
        %921 = vset.pattern.permute.xlu0 0
        %922 = vperm.xlu0 %921, %v876
        %v923 = vpop.permute.xlu0 %922
        %926 = vset.pattern.permute.xlu0 0
        %927 = vperm.xlu0 %926, %v877
        %v928 = vpop.permute.xlu0 %927
        %931 = vset.pattern.permute.xlu0 0
        %932 = vperm.xlu0 %931, %v878
        %v933 = vpop.permute.xlu0 %932
        %936 = vset.pattern.permute.xlu0 0
        %937 = vperm.xlu0 %936, %v879
        %v938 = vpop.permute.xlu0 %937
        %941 = vset.pattern.permute.xlu0 0
        %942 = vperm.xlu0 %941, %v880
        %v943 = vpop.permute.xlu0 %942
        %946 = vset.pattern.permute.xlu0 0
        %947 = vperm.xlu0 %946, %v881
        %v948 = vpop.permute.xlu0 %947
        %951 = vset.pattern.permute.xlu0 0
        %952 = vperm.xlu0 %951, %v882
        %v953 = vpop.permute.xlu0 %952
        %956 = vset.pattern.permute.xlu0 0
        %957 = vperm.xlu0 %956, %v883
        %v958 = vpop.permute.xlu0 %957
        %961 = vset.pattern.permute.xlu0 0
        %962 = vperm.xlu0 %961, %v884
        %v963 = vpop.permute.xlu0 %962
        %966 = vset.pattern.permute.xlu0 0
        %967 = vperm.xlu0 %966, %v885
        %v968 = vpop.permute.xlu0 %967
        %971 = vset.pattern.permute.xlu0 0
        %972 = vperm.xlu0 %971, %v886
        %v973 = vpop.permute.xlu0 %972
        %976 = vset.pattern.permute.xlu0 0
        %977 = vperm.xlu0 %976, %v887
        %v978 = vpop.permute.xlu0 %977
        %981 = vset.pattern.permute.xlu0 0
        %982 = vperm.xlu0 %981, %v888
        %v983 = vpop.permute.xlu0 %982
        %986 = vset.pattern.permute.xlu0 0
        %987 = vperm.xlu0 %986, %v889
        %v988 = vpop.permute.xlu0 %987
        %991 = vset.pattern.permute.xlu0 0
        %992 = vperm.xlu0 %991, %v890
        %v993 = vpop.permute.xlu0 %992
        %996 = vset.pattern.permute.xlu0 0
        %997 = vperm.xlu0 %996, %v891
        %v998 = vpop.permute.xlu0 %997
        %1001 = vset.pattern.permute.xlu0 0
        %1002 = vperm.xlu0 %1001, %v892
        %v1003 = vpop.permute.xlu0 %1002
        %1006 = vset.pattern.permute.xlu0 0
        %1007 = vperm.xlu0 %1006, %v893
        %v1008 = vpop.permute.xlu0 %1007
        %1011 = vset.pattern.permute.xlu0 0
        %1012 = vperm.xlu0 %1011, %v894
        %v1013 = vpop.permute.xlu0 %1012
        %1016 = vset.pattern.permute.xlu0 0
        %1017 = vperm.xlu0 %1016, %v895
        %v1018 = vpop.permute.xlu0 %1017
        %1021 = vset.pattern.permute.xlu0 0
        %1022 = vperm.xlu0 %1021, %v896
        %v1023 = vpop.permute.xlu0 %1022
        %1026 = vset.pattern.permute.xlu0 0
        %1027 = vperm.xlu0 %1026, %v897
        %v1028 = vpop.permute.xlu0 %1027
        %1031 = vset.pattern.permute.xlu0 0
        %1032 = vperm.xlu0 %1031, %v898
        %v1033 = vpop.permute.xlu0 %1032
        %1036 = vset.pattern.permute.xlu0 0
        %1037 = vperm.xlu0 %1036, %v899
        %v1038 = vpop.permute.xlu0 %1037
        %1041 = vset.pattern.permute.xlu0 0
        %1042 = vperm.xlu0 %1041, %v900
        %v1043 = vpop.permute.xlu0 %1042
        %1046 = vset.pattern.permute.xlu0 0
        %1047 = vperm.xlu0 %1046, %v901
        %v1048 = vpop.permute.xlu0 %1047
        %1051 = vset.pattern.permute.xlu0 0
        %1052 = vperm.xlu0 %1051, %v902
        %v1053 = vpop.permute.xlu0 %1052
        %1056 = vset.pattern.permute.xlu0 0
        %1057 = vperm.xlu0 %1056, %v903
        %v1058 = vpop.permute.xlu0 %1057
        %1061 = vset.pattern.permute.xlu0 0
        %1062 = vperm.xlu0 %1061, %v904
        %v1063 = vpop.permute.xlu0 %1062
        %v1065 = vsel %vm872, %v908, %v833
        %v1066 = vsel %vm872, %v913, %v834
        %v1067 = vsel %vm872, %v918, %v835
        %v1068 = vsel %vm872, %v923, %v836
        %v1069 = vsel %vm872, %v928, %v837
        %v1070 = vsel %vm872, %v933, %v838
        %v1071 = vsel %vm872, %v938, %v839
        %v1072 = vsel %vm872, %v943, %v840
        %v1073 = vsel %vm872, %v948, %v841
        %v1074 = vsel %vm872, %v953, %v842
        %v1075 = vsel %vm872, %v958, %v843
        %v1076 = vsel %vm872, %v963, %v844
        %v1077 = vsel %vm872, %v968, %v845
        %v1078 = vsel %vm872, %v973, %v846
        %v1079 = vsel %vm872, %v978, %v847
        %v1080 = vsel %vm872, %v983, %v848
        %v1081 = vsel %vm872, %v988, %v849
        %v1082 = vsel %vm872, %v993, %v850
        %v1083 = vsel %vm872, %v998, %v851
        %v1084 = vsel %vm872, %v1003, %v852
        %v1085 = vsel %vm872, %v1008, %v853
        %v1086 = vsel %vm872, %v1013, %v854
        %v1087 = vsel %vm872, %v1018, %v855
        %v1088 = vsel %vm872, %v1023, %v856
        %v1089 = vsel %vm872, %v1028, %v857
        %v1090 = vsel %vm872, %v1033, %v858
        %v1091 = vsel %vm872, %v1038, %v859
        %v1092 = vsel %vm872, %v1043, %v860
        %v1093 = vsel %vm872, %v1048, %v861
        %v1094 = vsel %vm872, %v1053, %v862
        %v1095 = vsel %vm872, %v1058, %v863
        %v1096 = vsel %vm872, %v1063, %v864
        %1097 = vst.msk [vmem:[%s284] sm:$0xff] %vm561, %v1065
        %1098 = vst.msk [vmem:[%s284 + $0x8] sm:$0xff] %vm561, %v1066
        %1099 = vst.msk [vmem:[%s284 + $0x10] sm:$0xff] %vm561, %v1067
        %1100 = vst.msk [vmem:[%s284 + $0x18] sm:$0xff] %vm561, %v1068
        %1101 = vst.msk [vmem:[%s284 + $0x20] sm:$0xff] %vm561, %v1069
        %1102 = vst.msk [vmem:[%s284 + $0x28] sm:$0xff] %vm561, %v1070
        %1103 = vst.msk [vmem:[%s284 + $0x30] sm:$0xff] %vm561, %v1071
        %1104 = vst.msk [vmem:[%s284 + $0x38] sm:$0xff] %vm561, %v1072
        %1105 = vst.msk [vmem:[%s284 + $0x40] sm:$0xff] %vm561, %v1073
        %1106 = vst.msk [vmem:[%s284 + $0x48] sm:$0xff] %vm561, %v1074
        %1107 = vst.msk [vmem:[%s284 + $0x50] sm:$0xff] %vm561, %v1075
        %1108 = vst.msk [vmem:[%s284 + $0x58] sm:$0xff] %vm561, %v1076
        %1109 = vst.msk [vmem:[%s284 + $0x60] sm:$0xff] %vm561, %v1077
        %1110 = vst.msk [vmem:[%s284 + $0x68] sm:$0xff] %vm561, %v1078
        %1111 = vst.msk [vmem:[%s284 + $0x70] sm:$0xff] %vm561, %v1079
        %1112 = vst.msk [vmem:[%s284 + $0x78] sm:$0xff] %vm561, %v1080
        %1113 = vst.msk [vmem:[%s284 + $0x80] sm:$0xff] %vm561, %v1081
        %1114 = vst.msk [vmem:[%s284 + $0x88] sm:$0xff] %vm561, %v1082
        %1115 = vst.msk [vmem:[%s284 + $0x90] sm:$0xff] %vm561, %v1083
        %1116 = vst.msk [vmem:[%s284 + $0x98] sm:$0xff] %vm561, %v1084
        %1117 = vst.msk [vmem:[%s284 + $0xa0] sm:$0xff] %vm561, %v1085
        %1118 = vst.msk [vmem:[%s284 + $0xa8] sm:$0xff] %vm561, %v1086
        %1119 = vst.msk [vmem:[%s284 + $0xb0] sm:$0xff] %vm561, %v1087
        %1120 = vst.msk [vmem:[%s284 + $0xb8] sm:$0xff] %vm561, %v1088
        %1121 = vst.msk [vmem:[%s284 + $0xc0] sm:$0xff] %vm561, %v1089
        %1122 = vst.msk [vmem:[%s284 + $0xc8] sm:$0xff] %vm561, %v1090
        %1123 = vst.msk [vmem:[%s284 + $0xd0] sm:$0xff] %vm561, %v1091
        %1124 = vst.msk [vmem:[%s284 + $0xd8] sm:$0xff] %vm561, %v1092
        %1125 = vst.msk [vmem:[%s284 + $0xe0] sm:$0xff] %vm561, %v1093
        %1126 = vst.msk [vmem:[%s284 + $0xe8] sm:$0xff] %vm561, %v1094
        %1127 = vst.msk [vmem:[%s284 + $0xf0] sm:$0xff] %vm561, %v1095
        %1128 = vst.msk [vmem:[%s284 + $0xf8] sm:$0xff] %vm561, %v1096
        %s1129 = sand.u32 %s172, 1
        %s1130 = scalar_lea.sflag [#allocation3], %s1129
        %s1131 = sand.u32 %s172, 1
        %s1132 = smul.addr %s1131, 256
        %s1133 = scalar_lea.vmem [#allocation2], %s1132
        // Predicated region
        $region41: #{tpu_custom_call.1} parent=39 // pred_check
          %p1134 = pneg %p182
        $region42: #{tpu_custom_call.1} parent=39 // pred_check_branch
          %1136 = sbr.rel (%p1134) target = $region44
        $region43: #{tpu_custom_call.1} parent=39 // pred_region
          %s1137 = smul.u32 16, %s25
          %s1138 = smul.u32 2, %s26
          %s1140 = ssub.s32 4096, 4096
          %1141 = vsyncadd %s1130, %s1140
          %s1142 = smul.addr %s1137, 2
          %s1143 = sadd.s32 %s1138, %s1142
          %s1144 = smul.addr %s24, 32
          %s1145 = sadd.s32 %s1143, %s1144
          %s1146 = smul.addr %s1145, 128
          %s1147 = scalar_lea.hbm %s5, %s1146
          %s1148 = sshll.u32 %s1133, 4
          %s1149 = int_to_ptr.vmem [resolvable:$true] %s1148
          %1154 = dma.vmem_to_hbm [thread:$0]  %s1149, 4096, %s1147, %s1130, 128, 128, 8
        $region44: #{tpu_custom_call.1} parent=39 // pred_fallthru
          _
      $region40: #{tpu_custom_call.1} parent=5 // pred_fallthru
        _
      %p1155 = scmp.le.s32.totalorder 2, %s14
      // Predicated region
      $region45: #{tpu_custom_call.1} parent=5 // pred_check
        %p1156 = pneg %p1155
      $region46: #{tpu_custom_call.1} parent=5 // pred_check_branch
        %1158 = sbr.rel (%p1156) target = $region48
      $region47: #{tpu_custom_call.1} parent=5 // pred_region
        %s1159 = ssub.s32 %s14, 2
        // Predicated region
        $region49: #{tpu_custom_call.1} parent=47 // pred_check
          %p1160 = pneg %p188
        $region50: #{tpu_custom_call.1} parent=47 // pred_check_branch
          %1162 = sbr.rel (%p1160) target = $region52
        $region51: #{tpu_custom_call.1} parent=47 // pred_region
          %s1163 = sand.u32 %s173, 1
          %s1164 = scalar_lea.sflag [#allocation3], %s1163
          %s1165 = sand.u32 %s173, 1
          %s1166 = smul.addr %s1165, 256
          %s1167 = scalar_lea.vmem [#allocation2], %s1166
          %1168 = dma.done %s1164, 4096
        $region52: #{tpu_custom_call.1} parent=47 // pred_fallthru
          _
      $region48: #{tpu_custom_call.1} parent=5 // pred_fallthru
        _
    $region6: #{tpu_custom_call.1} parent=1 // loop_footer
      %s18 = sadd.s32 1, %s14
    $region7: #{tpu_custom_call.1} parent=1 // loop_footer_branch
      %13 = sbr.rel target = $region3
    $region8: #{tpu_custom_call.1} parent=1 // loop_exit
      _
    %1169 = vsyncpa [#allocation3], 1
    %s1170 = scalar_lea.sflag [#allocation3], 1
    %1171 = vsyncpa %s1170, 1

</llo_original>
